<compile_context>
chip_gen: v7x
topology: tpu7x:2x2x1
jax: 0.10.0
libtpu: 0.0.40
codegen_flags: <defaults>
</compile_context>

<pallas_src>
import functools
import math

import jax
import jax.numpy as jnp
from jax.experimental import pallas as pl
from jax.experimental.pallas import tpu as pltpu


def _downsample_kernel(x_ref, p_ref, w_ref, o_ref, *, eps, concat_k):
    # x_ref: (tt, 2, n2, 2*d1)  -- fused block: k1=0 and k1=1 planes, one contiguous DMA
    # p_ref: (4, 2*d1)          -- rows = [gamma_lo, gamma_hi, beta_lo, beta_hi] (f32)
    # w_ref: (4*d1, d2)         -- bf16 projection weight
    # o_ref: (tt*n2, d2)
    tt, _, n2, two_d1 = x_ref.shape
    tm = tt * n2
    inv_d = 1.0 / (2.0 * two_d1)  # 1 / (4*d1)

    # Keep LN fully 3-D in f32; flatten only the cheap bf16 post-LN operands.
    xa = x_ref[:, 0].astype(jnp.float32)  # (tt, n2, 2*d1), k1 = 0 half
    xb = x_ref[:, 1].astype(jnp.float32)  # (tt, n2, 2*d1), k1 = 1 half

    # One-pass LayerNorm statistics over the merged 4*d1 channels.
    s1 = jnp.sum(xa, axis=-1, keepdims=True) + jnp.sum(xb, axis=-1, keepdims=True)
    s2 = (jnp.sum(xa * xa, axis=-1, keepdims=True)
          + jnp.sum(xb * xb, axis=-1, keepdims=True))
    mean = s1 * inv_d
    var = jnp.maximum(s2 * inv_d - mean * mean, 0.0)
    inv = jax.lax.rsqrt(var + eps)

    g_lo = p_ref[0:1, :]
    g_hi = p_ref[1:2, :]
    b_lo = p_ref[2:3, :]
    b_hi = p_ref[3:4, :]

    # Normalize + affine per half in f32, cast to bf16 for the MXU.
    ya = ((xa - mean) * inv * g_lo + b_lo).astype(jnp.bfloat16)
    yb = ((xb - mean) * inv * g_hi + b_hi).astype(jnp.bfloat16)

    # Flatten the bf16 tensors (half the repack bytes vs flattening the f32 inputs).
    ya = ya.reshape(tm, two_d1)
    yb = yb.reshape(tm, two_d1)

    if concat_k:
        # Narrow merged channels: a single deep-K (=4*d1) matmul uses the MXU depth
        # better than two shallow passes plus an f32 add.
        y = jnp.concatenate([ya, yb], axis=-1)
        acc = jnp.dot(y, w_ref[...], preferred_element_type=jnp.float32)
    else:
        # Wide merged channels: split-K avoids the lane concat entirely
        # (y @ W == y_lo @ W_lo + y_hi @ W_hi).
        acc = jnp.dot(ya, w_ref[0:two_d1, :], preferred_element_type=jnp.float32)
        acc = acc + jnp.dot(yb, w_ref[two_d1:2 * two_d1, :],
                            preferred_element_type=jnp.float32)

    o_ref[...] = acc.astype(o_ref.dtype)


def prepare_downsample_params(gamma, beta, w_proj):
    """Hoist per-call parameter prep out of the forward path (do this once at init).

    gamma/beta: (4*D1,) LayerNorm affine.  w_proj: (4*D1, D2) so the kernel computes
    y @ w_proj (i.e. torch weight transposed).
    """
    d = gamma.shape[0]
    two_d1 = d // 2
    params = jnp.stack(
        [gamma[:two_d1], gamma[two_d1:], beta[:two_d1], beta[two_d1:]], axis=0
    ).astype(jnp.float32)
    w = jnp.asarray(w_proj, jnp.bfloat16)  # bf16 operands for the MXU
    return params, w


def downsample(x, params, w, *, eps=1e-5, target_block_tokens=None):
    """x: [B, H, W, D1] -> [B, H//2, W//2, D2]  (Swin patch-merging downsample).

    `params`, `w` come from prepare_downsample_params(). Output dtype == x.dtype
    (use bf16 activations end-to-end for the memory-bound win).
    """
    b, h, w_sp, d1 = x.shape
    assert h % 2 == 0 and w_sp % 2 == 0
    n1, n2 = h // 2, w_sp // 2
    two_d1 = 2 * d1
    d = 4 * d1
    assert w.shape[0] == d, (w.shape, d)
    assert params.shape == (4, two_d1), params.shape
    d2 = w.shape[1]

    # Free reshape (contiguous): H -> (n1, 2) and (W*D1) -> (n2, 2*D1).
    # Merged channel order is (k1, k2, d1), matching
    # rearrange('b (n1 k1) (n2 k2) d1 -> b n1 n2 (k1 k2 d1)', k1=2, k2=2).
    xv = x.reshape(b * n1, 2, n2, two_d1)
    rows = b * n1
    m_total = rows * n2

    # Smaller token tiles for deep stages to respect the v7x 64 MiB VMEM budget.
    if target_block_tokens is None:
        target_block_tokens = 256 if two_d1 >= 1024 else 512

    # Tile the B*n1 axis; each grid step handles tt*n2 tokens.
    tt = max(1, target_block_tokens // max(n2, 1))
    # Keep >= ~4 grid steps when possible: v7x megacore sharding + DMA/compute overlap.
    min_grid = 4
    if rows >= min_grid:
        tt = min(tt, pl.cdiv(rows, min_grid))
    tt = min(tt, rows)
    # Output block row-count (tt*n2) must be sublane(8)-aligned unless it spans the
    # whole array (real Swin n2 in {28,14,7} is never a multiple of 8).
    step = 8 // math.gcd(n2, 8)
    if tt < rows:
        tt = max(step, (tt // step) * step)
        tt = min(tt, rows)
    tm = tt * n2
    grid = (pl.cdiv(rows, tt),)

    concat_k = two_d1 < 256

    # Note on a partial last block (rows % tt != 0): out-of-range input rows read
    # stale VMEM, but all math is strictly row-wise and their outputs are masked on
    # the store, so results are exact.
    out = pl.pallas_call(
        functools.partial(_downsample_kernel, eps=eps, concat_k=concat_k),
        out_shape=jax.ShapeDtypeStruct((m_total, d2), x.dtype),
        grid_spec=pltpu.PrefetchScalarGridSpec(
            num_scalar_prefetch=0,
            grid=grid,
            in_specs=[
                pl.BlockSpec((tt, 2, n2, two_d1), lambda i: (i, 0, 0, 0)),  # fused x
                pl.BlockSpec((4, two_d1), lambda i: (0, 0)),                # gamma/beta
                pl.BlockSpec((d, d2), lambda i: (0, 0)),                    # weight (bf16)
            ],
            out_specs=pl.BlockSpec((tm, d2), lambda i: (i, 0)),
        ),
        compiler_params=pltpu.CompilerParams(
            dimension_semantics=("parallel",),
            vmem_limit_bytes=48 * 1024 * 1024,
        ),
    )(xv, params, w)

    return out.reshape(b, n1, n2, d2)


def _reference(x, gamma, beta, w_proj, eps=1e-5):
    """Pure-JAX reference mirroring the kernel's numerics (f32 LN, bf16 MXU operands)."""
    b, h, w, d1 = x.shape
    n1, n2 = h // 2, w // 2
    xr = x.reshape(b, n1, 2, n2, 2, d1)
    xr = jnp.transpose(xr, (0, 1, 3, 2, 4, 5)).reshape(b, n1, n2, 4 * d1)
    xf = xr.astype(jnp.float32)
    mean = jnp.mean(xf, axis=-1, keepdims=True)
    var = jnp.mean(jnp.square(xf - mean), axis=-1, keepdims=True)
    y = (xf - mean) * jax.lax.rsqrt(var + eps) * gamma + beta
    out = jnp.dot(y.astype(jnp.bfloat16), w_proj.astype(jnp.bfloat16),
                  preferred_element_type=jnp.float32)
    return out.astype(x.dtype)


if __name__ == "__main__":
    key = jax.random.PRNGKey(0)
    k1, k2, k3, k4 = jax.random.split(key, 4)

    # Small shapes consistent with the module: emb_dim1=4, emb_dim2=8.
    B, H, W, D1 = 2, 16, 16, 4
    D2 = 8
    D = 4 * D1

    # bf16 activations end-to-end (memory-bound kernel -> halve I/O bytes).
    x = jax.random.normal(k1, (B, H, W, D1), dtype=jnp.float32).astype(jnp.bfloat16)
    # LayerNorm params (PyTorch default init weight=1, bias=0; perturbed so the
    # affine path is exercised).
    gamma = jnp.ones((D,), jnp.float32) + 0.01 * jax.random.normal(k2, (D,), jnp.float32)
    beta = 0.01 * jax.random.normal(k3, (D,), jnp.float32)
    # nn.Linear(4*emb_dim1, emb_dim2, bias=False): torch weight is (D2, D);
    # the kernel consumes its transpose (D, D2).
    w_torch = jax.random.normal(k4, (D2, D), dtype=jnp.float32) * (1.0 / jnp.sqrt(D))
    w_proj = w_torch.T

    params, w_bf16 = prepare_downsample_params(gamma, beta, w_proj)

    out = downsample(x, params, w_bf16)
    out = jax.block_until_ready(out)

    ref = _reference(x, gamma, beta, w_proj)
    assert out.shape == (B, H // 2, W // 2, D2), out.shape
    max_err = float(jnp.max(jnp.abs(out.astype(jnp.float32) - ref.astype(jnp.float32))))
    assert max_err < 5e-2, max_err

    print("KERNEL_OK")
</pallas_src>

<mosaic_0001>
module attributes {stable_mosaic.version = 11 : i64} {
  func.func @_downsample_kernel(%arg0: i32, %arg1: memref<4x2x8x8xbf16, #tpu.memory_space<vmem>>, %arg2: memref<4x8xf32, #tpu.memory_space<vmem>>, %arg3: memref<16x8xbf16, #tpu.memory_space<vmem>>, %arg4: memref<32x8xbf16, #tpu.memory_space<vmem>>) attributes {dimension_semantics = [#tpu.dimension_semantics<parallel>], iteration_bounds = array<i64: 4>, scalar_prefetch = 0 : i64, scratch_operands = 0 : i64, tpu.core_type = #tpu.core_type<tc>, window_params = [{transform_indices = @transform_0, window_bounds = array<i64: 4, 2, 8, 8>}, {pipeline_mode = #tpu.pipeline_mode<synchronous>, transform_indices = @transform_1, window_bounds = array<i64: 4, 8>}, {pipeline_mode = #tpu.pipeline_mode<synchronous>, transform_indices = @transform_2, window_bounds = array<i64: 16, 8>}, {transform_indices = @transform_3, window_bounds = array<i64: 32, 8>}]} {
    %c0 = arith.constant 0 : index
    %c0_0 = arith.constant 0 : index
    %c0_1 = arith.constant 0 : index
    %c0_2 = arith.constant 0 : index
    %0 = vector.load %arg1[%c0, %c0_0, %c0_1, %c0_2] : memref<4x2x8x8xbf16, #tpu.memory_space<vmem>>, vector<4x1x8x8xbf16>
    %1 = vector.shape_cast %0 : vector<4x1x8x8xbf16> to vector<4x8x8xbf16>
    %2 = arith.extf %1 : vector<4x8x8xbf16> to vector<4x8x8xf32>
    %c0_3 = arith.constant 0 : index
    %c1 = arith.constant 1 : index
    %c0_4 = arith.constant 0 : index
    %c0_5 = arith.constant 0 : index
    %3 = vector.load %arg1[%c0_3, %c1, %c0_4, %c0_5] : memref<4x2x8x8xbf16, #tpu.memory_space<vmem>>, vector<4x1x8x8xbf16>
    %4 = vector.shape_cast %3 : vector<4x1x8x8xbf16> to vector<4x8x8xbf16>
    %5 = arith.extf %4 : vector<4x8x8xbf16> to vector<4x8x8xf32>
    %cst = arith.constant dense<0.000000e+00> : vector<4x8xf32>
    %6 = vector.multi_reduction <add>, %2, %cst [2] : vector<4x8x8xf32> to vector<4x8xf32>
    %7 = vector.shape_cast %6 : vector<4x8xf32> to vector<4x8x1xf32>
    %cst_6 = arith.constant dense<0.000000e+00> : vector<4x8xf32>
    %8 = vector.multi_reduction <add>, %5, %cst_6 [2] : vector<4x8x8xf32> to vector<4x8xf32>
    %9 = vector.shape_cast %8 : vector<4x8xf32> to vector<4x8x1xf32>
    %10 = arith.addf %7, %9 : vector<4x8x1xf32>
    %11 = arith.mulf %2, %2 : vector<4x8x8xf32>
    %cst_7 = arith.constant dense<0.000000e+00> : vector<4x8xf32>
    %12 = vector.multi_reduction <add>, %11, %cst_7 [2] : vector<4x8x8xf32> to vector<4x8xf32>
    %13 = vector.shape_cast %12 : vector<4x8xf32> to vector<4x8x1xf32>
    %14 = arith.mulf %5, %5 : vector<4x8x8xf32>
    %cst_8 = arith.constant dense<0.000000e+00> : vector<4x8xf32>
    %15 = vector.multi_reduction <add>, %14, %cst_8 [2] : vector<4x8x8xf32> to vector<4x8xf32>
    %16 = vector.shape_cast %15 : vector<4x8xf32> to vector<4x8x1xf32>
    %17 = arith.addf %13, %16 : vector<4x8x1xf32>
    %cst_9 = arith.constant 6.250000e-02 : f32
    %18 = vector.broadcast %cst_9 : f32 to vector<4x8x1xf32>
    %19 = arith.mulf %10, %18 : vector<4x8x1xf32>
    %cst_10 = arith.constant 6.250000e-02 : f32
    %20 = vector.broadcast %cst_10 : f32 to vector<4x8x1xf32>
    %21 = arith.mulf %17, %20 : vector<4x8x1xf32>
    %22 = arith.mulf %19, %19 : vector<4x8x1xf32>
    %23 = arith.subf %21, %22 : vector<4x8x1xf32>
    %cst_11 = arith.constant 0.000000e+00 : f32
    %24 = vector.broadcast %cst_11 : f32 to vector<4x8x1xf32>
    %25 = arith.maximumf %23, %24 : vector<4x8x1xf32>
    %cst_12 = arith.constant 9.99999974E-6 : f32
    %26 = vector.broadcast %cst_12 : f32 to vector<4x8x1xf32>
    %27 = arith.addf %25, %26 : vector<4x8x1xf32>
    %28 = math.rsqrt %27 : vector<4x8x1xf32>
    %c0_13 = arith.constant 0 : index
    %c0_14 = arith.constant 0 : index
    %29 = vector.load %arg2[%c0_13, %c0_14] : memref<4x8xf32, #tpu.memory_space<vmem>>, vector<1x8xf32>
    %c1_15 = arith.constant 1 : index
    %c0_16 = arith.constant 0 : index
    %30 = vector.load %arg2[%c1_15, %c0_16] : memref<4x8xf32, #tpu.memory_space<vmem>>, vector<1x8xf32>
    %c2 = arith.constant 2 : index
    %c0_17 = arith.constant 0 : index
    %31 = vector.load %arg2[%c2, %c0_17] : memref<4x8xf32, #tpu.memory_space<vmem>>, vector<1x8xf32>
    %c3 = arith.constant 3 : index
    %c0_18 = arith.constant 0 : index
    %32 = vector.load %arg2[%c3, %c0_18] : memref<4x8xf32, #tpu.memory_space<vmem>>, vector<1x8xf32>
    %33 = vector.broadcast %19 : vector<4x8x1xf32> to vector<4x8x8xf32>
    %34 = arith.subf %2, %33 : vector<4x8x8xf32>
    %35 = vector.broadcast %28 : vector<4x8x1xf32> to vector<4x8x8xf32>
    %36 = arith.mulf %34, %35 : vector<4x8x8xf32>
    %37 = vector.shape_cast %29 : vector<1x8xf32> to vector<1x1x8xf32>
    %38 = vector.broadcast %37 : vector<1x1x8xf32> to vector<4x8x8xf32>
    %39 = arith.mulf %36, %38 : vector<4x8x8xf32>
    %40 = vector.shape_cast %31 : vector<1x8xf32> to vector<1x1x8xf32>
    %41 = vector.broadcast %40 : vector<1x1x8xf32> to vector<4x8x8xf32>
    %42 = arith.addf %39, %41 : vector<4x8x8xf32>
    %43 = arith.truncf %42 : vector<4x8x8xf32> to vector<4x8x8xbf16>
    %44 = vector.broadcast %19 : vector<4x8x1xf32> to vector<4x8x8xf32>
    %45 = arith.subf %5, %44 : vector<4x8x8xf32>
    %46 = vector.broadcast %28 : vector<4x8x1xf32> to vector<4x8x8xf32>
    %47 = arith.mulf %45, %46 : vector<4x8x8xf32>
    %48 = vector.shape_cast %30 : vector<1x8xf32> to vector<1x1x8xf32>
    %49 = vector.broadcast %48 : vector<1x1x8xf32> to vector<4x8x8xf32>
    %50 = arith.mulf %47, %49 : vector<4x8x8xf32>
    %51 = vector.shape_cast %32 : vector<1x8xf32> to vector<1x1x8xf32>
    %52 = vector.broadcast %51 : vector<1x1x8xf32> to vector<4x8x8xf32>
    %53 = arith.addf %50, %52 : vector<4x8x8xf32>
    %54 = arith.truncf %53 : vector<4x8x8xf32> to vector<4x8x8xbf16>
    %55 = vector.shape_cast %43 : vector<4x8x8xbf16> to vector<32x8xbf16>
    %56 = vector.shape_cast %54 : vector<4x8x8xbf16> to vector<32x8xbf16>
    %57 = tpu.concatenate %55, %56 in 1 : vector<32x8xbf16>, vector<32x8xbf16> -> vector<32x16xbf16>
    %c0_19 = arith.constant 0 : index
    %c0_20 = arith.constant 0 : index
    %58 = vector.load %arg3[%c0_19, %c0_20] : memref<16x8xbf16, #tpu.memory_space<vmem>>, vector<16x8xbf16>
    %cst_21 = arith.constant dense<0.000000e+00> : vector<32x8xf32>
    %59 = tpu.matmul %57, %58, %cst_21 {dimension_numbers = #tpu.dot_dimension_numbers<[1], [0], [0], [1], [0, 0, 1, 1], [], []>} : vector<32x16xbf16>, vector<16x8xbf16>, vector<32x8xf32> -> vector<32x8xf32>
    %60 = arith.truncf %59 : vector<32x8xf32> to vector<32x8xbf16>
    %c0_22 = arith.constant 0 : index
    %c0_23 = arith.constant 0 : index
    %61 = vector.load %arg4[%c0_22, %c0_23] : memref<32x8xbf16, #tpu.memory_space<vmem>>, vector<32x8xbf16>
    tpu.vector_store %arg4[%c0_22, %c0_23], %60 {strides = array<i32>} : memref<32x8xbf16, #tpu.memory_space<vmem>>, vector<32x8xbf16>,
    return
  }
  func.func @transform_0(%arg0: i32) -> (i32, i32, i32, i32) {
    %c0_i32 = arith.constant 0 : i32
    %c0_i32_0 = arith.constant 0 : i32
    %c0_i32_1 = arith.constant 0 : i32
    %c0_i32_2 = arith.constant 0 : i32
    return %arg0, %c0_i32, %c0_i32_0, %c0_i32_1 : i32, i32, i32, i32
  }
  func.func @transform_1(%arg0: i32) -> (i32, i32) {
    %c0_i32 = arith.constant 0 : i32
    %c0_i32_0 = arith.constant 0 : i32
    %c0_i32_1 = arith.constant 0 : i32
    return %c0_i32, %c0_i32_0 : i32, i32
  }
  func.func @transform_2(%arg0: i32) -> (i32, i32) {
    %c0_i32 = arith.constant 0 : i32
    %c0_i32_0 = arith.constant 0 : i32
    %c0_i32_1 = arith.constant 0 : i32
    return %c0_i32, %c0_i32_0 : i32, i32
  }
  func.func @transform_3(%arg0: i32) -> (i32, i32) {
    %c0_i32 = arith.constant 0 : i32
    %c0_i32_0 = arith.constant 0 : i32
    return %arg0, %c0_i32 : i32, i32
  }
}

</mosaic_0001>

<llo_original>
// kernel: tpu_custom_call.1
$region0: #{tpu_custom_call.1}
  #allocation0 [shape = 'u32[]', space=smem, size = 0x4, offset = 0x4, fixed_abs, tag = 'smem constant byte address 0x4 - core index']
  #allocation1 [shape = 'u32[144,128]{1,0:T(1,128)}', space=vmem, size = 0x12000, scoped, tag = 'internal scratch']
  %s0 = inlined_call_operand.vmem [shape: bf16[16,2,8,8], index: 0, kind: input, shape index: {}]
  %s1 = inlined_call_operand.vmem [shape: f32[4,8], index: 1, kind: input, shape index: {}]
  %s2 = inlined_call_operand.vmem [shape: bf16[16,8], index: 2, kind: input, shape index: {}]
  %s3 = inlined_call_operand.vmem [shape: bf16[128,8], index: 3, kind: output, shape index: {}]
  %s4 = sld [smem:[#allocation0]]
  $region45: #{tpu_custom_call.1} parent=0
    _
  %s6 = ssub.s32 1, %s4
  %s7 = scalar_select 0, %s6, %s4
  loop: start=0, step=1, limit=6
  $region2: #{tpu_custom_call.1} parent=0 // loop_pre_header
    _
  $region3: #{tpu_custom_call.1} parent=0 // loop_header
    %s9 = sphi 0, %s13
    %p10 = scmp.ge.s32.totalorder %s9, 6
    %s19 = sphi 0, %s21
    %s22 = sphi 0, %s19
    %s23 = sphi 0, %s22
    %s39 = sphi 0, %s23
    %s43 = sphi 0, %s43
    %s45 = sphi 0, %s43
    %s46 = sphi 0, %s45
    %s60 = sphi 0, %s46
    %s64 = sphi 0, %s64
    %s66 = sphi 0, %s64
    %s67 = sphi 0, %s66
    %s81 = sphi 0, %s67
    %s87 = sphi 0, %s89
    %s90 = sphi 0, %s87
    %s91 = sphi 0, %s90
    %s107 = sphi 0, %s91
  $region4: #{tpu_custom_call.1} parent=0 // loop_header_branch
    %12 = sbr.rel (%p10) target = $region8
  $region5: #{tpu_custom_call.1} parent=0 // loop_body
    %s14 = ssub.s32 %s9, 1
    %s15 = ssub.s32 %s9, 2
    %s16 = sadd.s32 %s9, 1
    %s17 = ssub.s32 %s9, %s16
    %p18 = scmp.eq.s32.totalorder %s17, 0
    %s20 = sadd.s32 %s19, 1
    %s21 = scalar_select %p18, %s19, %s20
    %p24 = pneg %p18
    %p25 = scmp.eq.s32.totalorder %s9, 3
    %p26 = por %p24, %p25
    %p27 = scmp.ne.s32.totalorder %s19, %s22
    %p28 = scmp.eq.s32.totalorder %s9, 0
    %p29 = por %p27, %p28
    %p30 = scmp.ne.s32.totalorder %s19, %s22
    %p31 = scmp.eq.s32.totalorder %s14, 3
    %p32 = por %p30, %p31
    %p33 = scmp.ne.s32.totalorder %s22, %s23
    %p34 = scmp.eq.s32.totalorder %s14, 0
    %p35 = por %p33, %p34
    %p36 = scmp.ne.s32.totalorder %s22, %s23
    %p37 = scmp.eq.s32.totalorder %s15, 3
    %p38 = por %p36, %p37
    %p40 = scmp.ne.s32.totalorder %s23, %s39
    %p41 = scmp.eq.s32.totalorder %s15, 0
    %p42 = por %p40, %p41
    %s44 = sadd.s32 %s43, 1
    %p47 = scmp.eq.s32.totalorder %s9, 3
    %p48 = scmp.ne.s32.totalorder %s43, %s45
    %p49 = scmp.eq.s32.totalorder %s9, 0
    %p50 = por %p48, %p49
    %p51 = scmp.ne.s32.totalorder %s43, %s45
    %p52 = scmp.eq.s32.totalorder %s14, 3
    %p53 = por %p51, %p52
    %p54 = scmp.ne.s32.totalorder %s45, %s46
    %p55 = scmp.eq.s32.totalorder %s14, 0
    %p56 = por %p54, %p55
    %p57 = scmp.ne.s32.totalorder %s45, %s46
    %p58 = scmp.eq.s32.totalorder %s15, 3
    %p59 = por %p57, %p58
    %p61 = scmp.ne.s32.totalorder %s46, %s60
    %p62 = scmp.eq.s32.totalorder %s15, 0
    %p63 = por %p61, %p62
    %s65 = sadd.s32 %s64, 1
    %p68 = scmp.eq.s32.totalorder %s9, 3
    %p69 = scmp.ne.s32.totalorder %s64, %s66
    %p70 = scmp.eq.s32.totalorder %s9, 0
    %p71 = por %p69, %p70
    %p72 = scmp.ne.s32.totalorder %s64, %s66
    %p73 = scmp.eq.s32.totalorder %s14, 3
    %p74 = por %p72, %p73
    %p75 = scmp.ne.s32.totalorder %s66, %s67
    %p76 = scmp.eq.s32.totalorder %s14, 0
    %p77 = por %p75, %p76
    %p78 = scmp.ne.s32.totalorder %s66, %s67
    %p79 = scmp.eq.s32.totalorder %s15, 3
    %p80 = por %p78, %p79
    %p82 = scmp.ne.s32.totalorder %s67, %s81
    %p83 = scmp.eq.s32.totalorder %s15, 0
    %p84 = por %p82, %p83
    %s85 = ssub.s32 %s9, %s16
    %p86 = scmp.eq.s32.totalorder %s85, 0
    %s88 = sadd.s32 %s87, 1
    %s89 = scalar_select %p86, %s87, %s88
    %p92 = pneg %p86
    %p93 = scmp.eq.s32.totalorder %s9, 3
    %p94 = por %p92, %p93
    %p95 = scmp.ne.s32.totalorder %s87, %s90
    %p96 = scmp.eq.s32.totalorder %s9, 0
    %p97 = por %p95, %p96
    %p98 = scmp.ne.s32.totalorder %s87, %s90
    %p99 = scmp.eq.s32.totalorder %s14, 3
    %p100 = por %p98, %p99
    %p101 = scmp.ne.s32.totalorder %s90, %s91
    %p102 = scmp.eq.s32.totalorder %s14, 0
    %p103 = por %p101, %p102
    %p104 = scmp.ne.s32.totalorder %s90, %s91
    %p105 = scmp.eq.s32.totalorder %s15, 3
    %p106 = por %p104, %p105
    %p108 = scmp.ne.s32.totalorder %s91, %s107
    %p109 = scmp.eq.s32.totalorder %s15, 0
    %p110 = por %p108, %p109
    %p111 = scmp.le.s32.totalorder 1, %s9
    %p112 = scmp.lt.s32.totalorder %s9, 5
    %p113 = pnand %p111, %p112
    %p114 = pneg %p113
    // Predicated region
    $region9: #{tpu_custom_call.1} parent=5 // pred_check
      _
    $region10: #{tpu_custom_call.1} parent=5 // pred_check_branch
      %116 = sbr.rel (%p113) target = $region12
    $region11: #{tpu_custom_call.1} parent=5 // pred_region
      %s117 = ssub.s32 %s9, 1
      // Predicated region
      $region13: #{tpu_custom_call.1} parent=11 // pred_check
        %p118 = pneg %p56
      $region14: #{tpu_custom_call.1} parent=11 // pred_check_branch
        %120 = sbr.rel (%p118) target = $region16
      $region15: #{tpu_custom_call.1} parent=11 // pred_region
        _
      $region16: #{tpu_custom_call.1} parent=11 // pred_fallthru
        _
      // Predicated region
      $region17: #{tpu_custom_call.1} parent=11 // pred_check
        %p121 = pneg %p77
      $region18: #{tpu_custom_call.1} parent=11 // pred_check_branch
        %123 = sbr.rel (%p121) target = $region20
      $region19: #{tpu_custom_call.1} parent=11 // pred_region
        _
      $region20: #{tpu_custom_call.1} parent=11 // pred_fallthru
        _
    $region12: #{tpu_custom_call.1} parent=5 // pred_fallthru
      _
    %p124 = scmp.lt.s32.totalorder %s9, 4
    // Predicated region
    $region21: #{tpu_custom_call.1} parent=5 // pred_check
      %p125 = pneg %p124
    $region22: #{tpu_custom_call.1} parent=5 // pred_check_branch
      %127 = sbr.rel (%p125) target = $region24
    $region23: #{tpu_custom_call.1} parent=5 // pred_region
      // Predicated region
      $region25: #{tpu_custom_call.1} parent=23 // pred_check
        %p128 = pneg %p29
      $region26: #{tpu_custom_call.1} parent=23 // pred_check_branch
        %130 = sbr.rel (%p128) target = $region28
      $region27: #{tpu_custom_call.1} parent=23 // pred_region
        %s131 = smul.u32 4, %s9
        %p132 = scmp.lt.s32.totalorder %s131, 15
        %s133 = scalar_select %p132, %s131, 15
        %s134 = smul.addr %s133, 2
        %s135 = smul.addr %s134, 4
        %s136 = scalar_lea.vmem %s0, %s135
        %s137 = smul.u32 4, %s9
      $region28: #{tpu_custom_call.1} parent=23 // pred_fallthru
        _
    $region24: #{tpu_custom_call.1} parent=5 // pred_fallthru
      _
    %p138 = scmp.le.s32.totalorder 1, %s9
    %p139 = scmp.lt.s32.totalorder %s9, 5
    %p140 = pnand %p138, %p139
    %p141 = pneg %p140
    // Predicated region
    $region29: #{tpu_custom_call.1} parent=5 // pred_check
      _
    $region30: #{tpu_custom_call.1} parent=5 // pred_check_branch
      %143 = sbr.rel (%p140) target = $region32
    $region31: #{tpu_custom_call.1} parent=5 // pred_region
      %s144 = ssub.s32 %s9, 1
      %s145 = smul.u32 4, %s14
      %p146 = scmp.lt.s32.totalorder %s145, 15
      %s147 = scalar_select %p146, %s145, 15
      %s148 = smul.addr %s147, 2
      %s149 = smul.addr %s148, 4
      %s150 = scalar_lea.vmem %s0, %s149
      %p151 = pneg %p35
      %p152 = pneg %p32
      %p153 = pneg %p56
      %p154 = pneg %p53
      %p155 = pneg %p77
      %p156 = pneg %p74
      %p157 = pneg %p103
      %p158 = pneg %p100
      %s159 = smul.u32 4, %s14
      %p160 = scmp.lt.s32.totalorder %s159, 15
      %s161 = scalar_select %p160, %s159, 15
      %s162 = smul.addr %s161, 4
      %s163 = scalar_lea.vmem %s3, %s162
      %s164 = smul.u32 4, %s14
      %p165 = scmp.lt.s32.totalorder %s164, 15
      %s166 = scalar_select %p165, %s164, 15
      %s167 = smul.addr %s166, 2
      %s168 = smul.addr %s167, 4
      %s169 = scalar_lea.vmem %s0, %s168
      %s170 = smul.u32 4, %s14
      %s171 = smul.u32 4, %s14
      %p172 = scmp.lt.s32.totalorder %s171, 15
      %s173 = scalar_select %p172, %s171, 15
      %s174 = smul.addr %s173, 4
      %s175 = scalar_lea.vmem %s3, %s174
      %s176 = smul.u32 4, %s14
      %v178 = vld [vmem:[%s169] sm:$0xf]
      %v179 = vld [vmem:[%s169 + $0x8] sm:$0xf]
      %v180 = vld [vmem:[%s169 + $0x10] sm:$0xf]
      %v181 = vld [vmem:[%s169 + $0x18] sm:$0xf]
      %v182 = vunpack.c.l.bf16 %v178
      %v183 = vunpack.c.l.bf16 %v179
      %v184 = vunpack.c.l.bf16 %v180
      %v185 = vunpack.c.l.bf16 %v181
      %s186 = scalar_lea.vmem %s169, 4
      %v187 = vld [vmem:[%s186] sm:$0xf]
      %v188 = vld [vmem:[%s186 + $0x8] sm:$0xf]
      %v189 = vld [vmem:[%s186 + $0x10] sm:$0xf]
      %v190 = vld [vmem:[%s186 + $0x18] sm:$0xf]
      %v191 = vunpack.c.l.bf16 %v187
      %v192 = vunpack.c.l.bf16 %v188
      %v193 = vunpack.c.l.bf16 %v189
      %v194 = vunpack.c.l.bf16 %v190
      %vm195 = vcmask 64512
      %v196 = vsel %vm195, %v182, 0.0
      %197 = vadd.xlane.f32.xlu0 %v196
      %v198 = vpop.xlane.xlu0 %197
      %v199 = vsel %vm195, %v183, 0.0
      %200 = vadd.xlane.f32.xlu0 %v199
      %v201 = vpop.xlane.xlu0 %200
      %v202 = vsel %vm195, %v184, 0.0
      %203 = vadd.xlane.f32.xlu0 %v202
      %v204 = vpop.xlane.xlu0 %203
      %v205 = vsel %vm195, %v185, 0.0
      %206 = vadd.xlane.f32.xlu0 %v205
      %v207 = vpop.xlane.xlu0 %206
      %v208 = vsel %vm195, %v191, 0.0
      %209 = vadd.xlane.f32.xlu0 %v208
      %v210 = vpop.xlane.xlu0 %209
      %v211 = vsel %vm195, %v192, 0.0
      %212 = vadd.xlane.f32.xlu0 %v211
      %v213 = vpop.xlane.xlu0 %212
      %v214 = vsel %vm195, %v193, 0.0
      %215 = vadd.xlane.f32.xlu0 %v214
      %v216 = vpop.xlane.xlu0 %215
      %v217 = vsel %vm195, %v194, 0.0
      %218 = vadd.xlane.f32.xlu0 %v217
      %v219 = vpop.xlane.xlu0 %218
      %v220 = vadd.f32 %v198, %v210
      %v221 = vadd.f32 %v201, %v213
      %v222 = vadd.f32 %v204, %v216
      %v223 = vadd.f32 %v207, %v219
      %v224 = vmul.f32 %v182, %v182
      %v225 = vmul.f32 %v183, %v183
      %v226 = vmul.f32 %v184, %v184
      %v227 = vmul.f32 %v185, %v185
      %v228 = vsel %vm195, %v224, 0.0
      %229 = vadd.xlane.f32.xlu0 %v228
      %v230 = vpop.xlane.xlu0 %229
      %v231 = vsel %vm195, %v225, 0.0
      %232 = vadd.xlane.f32.xlu0 %v231
      %v233 = vpop.xlane.xlu0 %232
      %v234 = vsel %vm195, %v226, 0.0
      %235 = vadd.xlane.f32.xlu0 %v234
      %v236 = vpop.xlane.xlu0 %235
      %v237 = vsel %vm195, %v227, 0.0
      %238 = vadd.xlane.f32.xlu0 %v237
      %v239 = vpop.xlane.xlu0 %238
      %v240 = vmul.f32 %v191, %v191
      %v241 = vmul.f32 %v192, %v192
      %v242 = vmul.f32 %v193, %v193
      %v243 = vmul.f32 %v194, %v194
      %v244 = vsel %vm195, %v240, 0.0
      %245 = vadd.xlane.f32.xlu0 %v244
      %v246 = vpop.xlane.xlu0 %245
      %v247 = vsel %vm195, %v241, 0.0
      %248 = vadd.xlane.f32.xlu0 %v247
      %v249 = vpop.xlane.xlu0 %248
      %v250 = vsel %vm195, %v242, 0.0
      %251 = vadd.xlane.f32.xlu0 %v250
      %v252 = vpop.xlane.xlu0 %251
      %v253 = vsel %vm195, %v243, 0.0
      %254 = vadd.xlane.f32.xlu0 %v253
      %v255 = vpop.xlane.xlu0 %254
      %v256 = vadd.f32 %v230, %v246
      %v257 = vadd.f32 %v233, %v249
      %v258 = vadd.f32 %v236, %v252
      %v259 = vadd.f32 %v239, %v255
      %v260 = vmul.f32 %v220, 0.0625
      %v261 = vmul.f32 %v221, 0.0625
      %v262 = vmul.f32 %v222, 0.0625
      %v263 = vmul.f32 %v223, 0.0625
      %v264 = vmul.f32 %v256, 0.0625
      %v265 = vmul.f32 %v257, 0.0625
      %v266 = vmul.f32 %v258, 0.0625
      %v267 = vmul.f32 %v259, 0.0625
      %v268 = vmul.f32 %v260, %v260
      %v269 = vmul.f32 %v261, %v261
      %v270 = vmul.f32 %v262, %v262
      %v271 = vmul.f32 %v263, %v263
      %v272 = vsub.f32 %v264, %v268
      %v273 = vsub.f32 %v265, %v269
      %v274 = vsub.f32 %v266, %v270
      %v275 = vsub.f32 %v267, %v271
      %v276 = vmax.f32 %v272, 0.0
      %v277 = vmax.f32 %v273, 0.0
      %v278 = vmax.f32 %v274, 0.0
      %v279 = vmax.f32 %v275, 0.0
      %v280 = vadd.f32 %v276, 1e-05
      %v281 = vadd.f32 %v277, 1e-05
      %v282 = vadd.f32 %v278, 1e-05
      %v283 = vadd.f32 %v279, 1e-05
      %v284 = vrsqrt.pop %v280
      %v285 = vrsqrt.pop %v281
      %v286 = vrsqrt.pop %v282
      %v287 = vrsqrt.pop %v283
      %v288 = vld [vmem:[%s1] sm:$0x1]
      %v289 = vld [vmem:[%s1 + $0x1] sm:$0x1]
      %v290 = vld [vmem:[%s1 + $0x2] sm:$0x1]
      %v291 = vld [vmem:[%s1 + $0x3] sm:$0x1]
      %v292 = vsub.f32 %v182, %v260
      %v293 = vsub.f32 %v183, %v261
      %v294 = vsub.f32 %v184, %v262
      %v295 = vsub.f32 %v185, %v263
      %v296 = vmul.f32 %v292, %v284
      %v297 = vmul.f32 %v293, %v285
      %v298 = vmul.f32 %v294, %v286
      %v299 = vmul.f32 %v295, %v287
      %v300 = vlaneseq
      %v301 = vshrl.u32 %v300, 7
      %v302 = vsub.s32 0, %v301
      %v303 = vrot.slane %v288, %v302
      %v304 = vmul.f32 %v296, %v303
      %v305 = vmul.f32 %v297, %v303
      %v306 = vmul.f32 %v298, %v303
      %v307 = vmul.f32 %v299, %v303
      %v308 = vlaneseq
      %v309 = vshrl.u32 %v308, 7
      %v310 = vsub.s32 0, %v309
      %v311 = vrot.slane %v290, %v310
      %v312 = vadd.f32 %v304, %v311
      %v313 = vadd.f32 %v305, %v311
      %v314 = vadd.f32 %v306, %v311
      %v315 = vadd.f32 %v307, %v311
      %v316 = vpack.c.bf16 %v312, %v312
      %v317 = vpack.c.bf16 %v313, %v313
      %v318 = vpack.c.bf16 %v314, %v314
      %v319 = vpack.c.bf16 %v315, %v315
      %v320 = vsub.f32 %v191, %v260
      %v321 = vsub.f32 %v192, %v261
      %v322 = vsub.f32 %v193, %v262
      %v323 = vsub.f32 %v194, %v263
      %v324 = vmul.f32 %v320, %v284
      %v325 = vmul.f32 %v321, %v285
      %v326 = vmul.f32 %v322, %v286
      %v327 = vmul.f32 %v323, %v287
      %v328 = vlaneseq
      %v329 = vshrl.u32 %v328, 7
      %v330 = vsub.s32 0, %v329
      %v331 = vrot.slane %v289, %v330
      %v332 = vmul.f32 %v324, %v331
      %v333 = vmul.f32 %v325, %v331
      %v334 = vmul.f32 %v326, %v331
      %v335 = vmul.f32 %v327, %v331
      %v336 = vlaneseq
      %v337 = vshrl.u32 %v336, 7
      %v338 = vsub.s32 0, %v337
      %v339 = vrot.slane %v291, %v338
      %v340 = vadd.f32 %v332, %v339
      %v341 = vadd.f32 %v333, %v339
      %v342 = vadd.f32 %v334, %v339
      %v343 = vadd.f32 %v335, %v339
      %v344 = vpack.c.bf16 %v340, %v340
      %v345 = vpack.c.bf16 %v341, %v341
      %v346 = vpack.c.bf16 %v342, %v342
      %v347 = vpack.c.bf16 %v343, %v343
      %v352 = vunpack.c.l.b16 %v316
      %v353 = vunpack.c.l.b16 %v317
      %v354 = vunpack.c.l.b16 %v318
      %v355 = vunpack.c.l.b16 %v319
      %v356 = vpack.c.b16 %v353, %v352
      %v357 = vpack.c.b16 %v355, %v354
      %v362 = vunpack.c.l.b16 %v344
      %v363 = vunpack.c.l.b16 %v345
      %v364 = vunpack.c.l.b16 %v346
      %v365 = vunpack.c.l.b16 %v347
      %v366 = vpack.c.b16 %v363, %v362
      %v367 = vpack.c.b16 %v365, %v364
      %368 = vrot.lane.b32.xlu0 %v366, 8
      %v369 = vpop.permute.xlu0 %368
      %370 = vrot.lane.b32.xlu0 %v367, 8
      %v371 = vpop.permute.xlu0 %370
      %v374 = vsel %vm195, %v356, %v369
      %v377 = vsel %vm195, %v357, %v371
      %v378 = vld [vmem:[%s2] sm:$0xf]
      %v379 = vld [vmem:[%s2 + $0x4] sm:$0xf]
      %v382 = vunpack.c.l.b16 %v378
      %v383 = vunpack.c.l.b16 %v379
      %v384 = vpack.c.b16 %v383, %v382
      %vm386 = vcmask 130048
      %v387 = vsel %vm386, %v374, 0
      %v389 = vsel %vm386, %v377, 0
      %391 = vmatprep.subr.bf16.mxu0 0
      %392 = vmatpush1.bf16.msra.mxu0 %v384
      %393 = vmatprep.subr.bf16.mxu0 0
      %394 = vmatpush1.bf16.msra.mxu0 0
      %395 = vmatprep.subr.bf16.mxu0 0
      %396 = vmatpush1.bf16.msra.mxu0 0
      %397 = vmatprep.subr.bf16.mxu0 0
      %398 = vmatpush1.bf16.msra.mxu0 0
      %399 = vmatprep.subr.bf16.mxu0 0
      %400 = vmatpush1.bf16.msra.mxu0 0
      %401 = vmatprep.subr.bf16.mxu0 0
      %402 = vmatpush1.bf16.msra.mxu0 0
      %403 = vmatprep.subr.bf16.mxu0 0
      %404 = vmatpush1.bf16.msra.mxu0 0
      %405 = vmatprep.subr.bf16.mxu0 0
      %406 = vmatpush1.bf16.msra.mxu0 0
      %407 = vmatprep.subr.bf16.mxu0 0
      %408 = vmatpush1.bf16.msra.mxu0 0
      %409 = vmatprep.subr.bf16.mxu0 0
      %410 = vmatpush1.bf16.msra.mxu0 0
      %411 = vmatprep.subr.bf16.mxu0 0
      %412 = vmatpush1.bf16.msra.mxu0 0
      %413 = vmatprep.subr.bf16.mxu0 0
      %414 = vmatpush1.bf16.msra.mxu0 0
      %415 = vmatprep.subr.bf16.mxu0 0
      %416 = vmatpush1.bf16.msra.mxu0 0
      %417 = vmatprep.subr.bf16.mxu0 0
      %418 = vmatpush1.bf16.msra.mxu0 0
      %419 = vmatprep.subr.bf16.mxu0 0
      %420 = vmatpush1.bf16.msra.mxu0 0
      %421 = vmatprep.subr.bf16.mxu0 0
      %422 = vmatpush1.bf16.msra.mxu0 0
      %423 = vmatprep.mubr.bf16.mxu0 0
      %424 = vmatmul.mubr.bf16.gmra.mrb[0].mxu0 %v387
      %v425 = vpop.f32.mrb[0].mxu0
      %v426 = vadd.f32 0.0, %v425
      %v427 = vpop.f32.mrb[0].mxu0
      %v428 = vpop.f32.mrb[0].mxu0
      %v429 = vadd.f32 0.0, %v428
      %v430 = vpop.f32.mrb[0].mxu0
      %431 = vmatprep.mubr.bf16.mxu0 0
      %432 = vmatmul.mubr.bf16.gmra.mrb[0].mxu0 %v389
      %v433 = vpop.f32.mrb[0].mxu0
      %v434 = vadd.f32 0.0, %v433
      %v435 = vpop.f32.mrb[0].mxu0
      %v436 = vpop.f32.mrb[0].mxu0
      %v437 = vadd.f32 0.0, %v436
      %v438 = vpop.f32.mrb[0].mxu0
      %439 = vdwg.mxu0
      %v440 = vpack.c.bf16 %v429, %v426
      %v441 = vpack.c.bf16 %v437, %v434
      %v444 = vunpack.c.l.b16 %v440
      %v445 = vunpack.c.h.b16 %v440
      %v446 = vunpack.c.l.b16 %v441
      %v447 = vunpack.c.h.b16 %v441
      %v448 = vpack.c.b16 %v444, %v444
      %v449 = vpack.c.b16 %v445, %v445
      %v450 = vpack.c.b16 %v446, %v446
      %v451 = vpack.c.b16 %v447, %v447
      %vm456 = vcmask 60416
      %457 = vst.msk [vmem:[%s175] sm:$0xf] %vm456, %v448
      %458 = vst.msk [vmem:[%s175 + $0x4] sm:$0xf] %vm456, %v449
      %459 = vst.msk [vmem:[%s175 + $0x8] sm:$0xf] %vm456, %v450
      %460 = vst.msk [vmem:[%s175 + $0xc] sm:$0xf] %vm456, %v451
      %s461 = smul.u32 4, %s14
      %p462 = scmp.lt.s32.totalorder %s461, 15
      %s463 = scalar_select %p462, %s461, 15
      %s464 = smul.addr %s463, 4
      %s465 = scalar_lea.vmem %s3, %s464
      // Predicated region
      $region33: #{tpu_custom_call.1} parent=31 // pred_check
        %p466 = pneg %p100
      $region34: #{tpu_custom_call.1} parent=31 // pred_check_branch
        %468 = sbr.rel (%p466) target = $region36
      $region35: #{tpu_custom_call.1} parent=31 // pred_region
        %s469 = smul.u32 4, %s14
      $region36: #{tpu_custom_call.1} parent=31 // pred_fallthru
        _
    $region32: #{tpu_custom_call.1} parent=5 // pred_fallthru
      _
    %p470 = scmp.le.s32.totalorder 2, %s9
    // Predicated region
    $region37: #{tpu_custom_call.1} parent=5 // pred_check
      %p471 = pneg %p470
    $region38: #{tpu_custom_call.1} parent=5 // pred_check_branch
      %473 = sbr.rel (%p471) target = $region40
    $region39: #{tpu_custom_call.1} parent=5 // pred_region
      %s474 = ssub.s32 %s9, 2
      // Predicated region
      $region41: #{tpu_custom_call.1} parent=39 // pred_check
        %p475 = pneg %p106
      $region42: #{tpu_custom_call.1} parent=39 // pred_check_branch
        %477 = sbr.rel (%p475) target = $region44
      $region43: #{tpu_custom_call.1} parent=39 // pred_region
        %s478 = smul.u32 4, %s15
        %p479 = scmp.lt.s32.totalorder %s478, 15
        %s480 = scalar_select %p479, %s478, 15
        %s481 = smul.addr %s480, 4
        %s482 = scalar_lea.vmem %s3, %s481
      $region44: #{tpu_custom_call.1} parent=39 // pred_fallthru
        _
    $region40: #{tpu_custom_call.1} parent=5 // pred_fallthru
      _
  $region6: #{tpu_custom_call.1} parent=0 // loop_footer
    %s13 = sadd.s32 1, %s9
  $region7: #{tpu_custom_call.1} parent=0 // loop_footer_branch
    %8 = sbr.rel target = $region3
  $region8: #{tpu_custom_call.1} parent=0 // loop_exit
    _

</llo_original>
